<compile_context>
chip_gen: v7x
topology: tpu7x:2x2x1
jax: 0.10.0
libtpu: 0.0.40
codegen_flags: <defaults>
</compile_context>

<pallas_src>
import functools

import jax
import jax.numpy as jnp
from jax import lax
from jax.experimental import pallas as pl
from jax.experimental.pallas import tpu as pltpu


# Large negative (finite!) fill value for masked lanes.  Finite so that
# MASK - MASK == 0 exactly and the online-softmax update can never produce
# inf - inf = NaN; exp(MASK - finite) underflows cleanly to 0.
_MASK_VALUE = -0.7 * float(jnp.finfo(jnp.float32).max)

# Static-unroll cap on 128-lane chunks per K tile (keeps the kernel free of
# dynamic lane-dim slicing and keeps trace/compile size bounded).
_MAX_CHUNKS = 64


def _contrastive_ce_kernel(pos_ref, neg_ref, inval_ref, out_ref, m_sc, s_sc,
                           *, inv_temp, n_rows, k_total, k_tile, n_k_tiles,
                           lanes):
    i = pl.program_id(0)          # row-tile index   ("parallel")
    k = pl.program_id(1)          # K-tile index     ("arbitrary", innermost)
    tn = m_sc.shape[0]

    # ---- init lane-parallel online-LSE state ------------------------------
    @pl.when(k == 0)
    def _():
        m_sc[...] = jnp.full(m_sc.shape, _MASK_VALUE, m_sc.dtype)
        s_sc[...] = jnp.zeros(s_sc.shape, s_sc.dtype)

    # ---- fold one (tn, k_tile) tile of negatives --------------------------
    def load_chunk(c, limit):
        start = c * lanes                                   # static Python int
        nv = neg_ref[:, start:start + lanes].astype(jnp.float32) * inv_temp
        if limit is not None:                               # ragged-K lanes only
            lane = lax.broadcasted_iota(jnp.int32, nv.shape, 1) + start
            nv = jnp.where(lane < limit, nv, _MASK_VALUE)
        return nv

    def fold_tile(valid_in_tile):
        # valid_in_tile: static number of valid lanes in this K tile.
        n_live = pl.cdiv(valid_in_tile, lanes)

        def chunk_limit(c):
            return None if (c + 1) * lanes <= valid_in_tile else valid_in_tile

        m_prev = m_sc[...]
        # pass 1 (VALU only): lane-wise running max across this tile's chunks
        m_new = m_prev
        for c in range(n_live):
            m_new = jnp.maximum(m_new, load_chunk(c, chunk_limit(c)))
        # single rescale of the running sum: one EUP exp per element of the
        # (tn, lanes) state per *tile*, not per chunk
        s = s_sc[...] * jnp.exp(m_prev - m_new)
        # pass 2 (EUP exp + VALU add): accumulate exps against the new max
        for c in range(n_live):
            s = s + jnp.exp(load_chunk(c, chunk_limit(c)) - m_new)
        m_sc[...] = m_new
        s_sc[...] = s

    rem_last = k_total - (n_k_tiles - 1) * k_tile      # static, in (0, k_tile]
    if rem_last == k_tile:
        fold_tile(k_tile)           # K divides evenly: one unconditional path
    else:
        if n_k_tiles > 1:
            @pl.when(k < n_k_tiles - 1)
            def _():
                fold_tile(k_tile)

        @pl.when(k == n_k_tiles - 1)
        def _():
            fold_tile(rem_last)     # ragged-K masking only on the last tile

    # ---- finalize: single XLU reduce, fold in pos, emit (total, count) ----
    @pl.when(k == n_k_tiles - 1)
    def _():
        p = pos_ref[...].astype(jnp.float32) * inv_temp            # (tn, 1)
        m_lane = m_sc[...]
        s_lane = s_sc[...]
        m_neg = jnp.max(m_lane, axis=1, keepdims=True)             # (tn, 1)
        s_neg = jnp.sum(s_lane * jnp.exp(m_lane - m_neg), axis=1, keepdims=True)
        m_all = jnp.maximum(m_neg, p)
        s_all = s_neg * jnp.exp(m_neg - m_all) + jnp.exp(p - m_all)
        lse = m_all + jnp.log(s_all)
        per_row = lse - p                                          # (tn, 1)

        valid = inval_ref[...] == 0                  # ignore_index=255 rows
        if n_rows % tn != 0:
            # Ragged last row tile: drop out-of-bounds (garbage) rows.
            row = lax.broadcasted_iota(jnp.int32, (tn, 1), 0) + i * tn
            valid = valid & (row < n_rows)

        total = jnp.sum(jnp.where(valid, per_row, 0.0))   # where, not mul: no NaN leak
        count = jnp.sum(valid.astype(jnp.float32))

        # Lane-dense (1, 8, 128) partial: sublane 0 = total, sublane 1 = count.
        sub = lax.broadcasted_iota(jnp.int32, out_ref.shape, 1)
        out_ref[...] = jnp.where(sub == 0, total,
                                 jnp.where(sub == 1, count, 0.0))


def contrastive_head_loss(pos, neg, invalid=None, temperature=0.1,
                          row_tile=None, k_tile=None, neg_buffers=2):
    """JAX/Pallas equivalent of ContrastiveHead.forward.

    Args:
      pos: (N, 1) positive similarities (native dtype; bf16 streams as bf16).
      neg: (N, K) negative similarities.
      invalid: optional (N,) or (N, 1) bool/int mask of rows to ignore
        (rows whose label would be set to ignore_index=255).
      temperature: softmax temperature (Python float; baked into the kernel,
        so a changing temperature forces a retrace -- compile-time only).
      row_tile / k_tile: optional manual tile-size overrides.
      neg_buffers: pipeline depth for the streamed neg tiles (2 = default
        double buffering; 3 can hide DMA jitter on v5e).
    Returns:
      scalar float32 loss (NaN if every row is ignored, matching PyTorch).
    """
    N, K = neg.shape
    assert pos.shape == (N, 1)
    itemsize = jnp.dtype(neg.dtype).itemsize

    def _ru(x, m):
        return -(-x // m) * m

    # Sub-32-bit dtypes pack rows along sublanes: align row tiles to the
    # packed granule (8 rows f32, 16 bf16, 32 for 1-byte types).
    row_align = {4: 8, 2: 16, 1: 32}.get(itemsize, 8)

    # ---- tile-size policy --------------------------------------------------
    # Pure HBM-streaming reduction (no MXU): per-grid-step overhead is
    # ~0.35 us, so every neg tile should carry several MiB of HBM traffic.
    # VMEM is not the constraint (2 x 8 MiB double-buffered tiles fit easily
    # even within v7x's 64 MiB); faster HBM wants bigger tiles, not smaller.
    TARGET_TILE_BYTES = 8 * 1024 * 1024

    # Keep >= 2 row tiles (>= 4 for large N) so the "parallel" row axis can
    # shard across TensorCores; each TC has its own EUP, the binding unit for
    # bf16 inputs at v7x HBM bandwidth.
    if N >= 1024:
        want_row_tiles = 4
    elif N >= 2 * row_align:
        want_row_tiles = 2
    else:
        want_row_tiles = 1
    n_cap = N if N <= row_align else _ru(N, row_align)
    if want_row_tiles > 1:
        tn_shard_cap = _ru(pl.cdiv(N, want_row_tiles), row_align)
    else:
        tn_shard_cap = n_cap

    # K tile: lane-aligned, sized from the byte budget (adaptive, no hard cap
    # other than the static-unroll chunk limit).
    # TODO(synk): extreme skinny-N / fat-K shapes (N <~ 64, K >~ 1M) would want
    # tk beyond _MAX_CHUNKS*128 (dynamic lane-dim chunking or a 3-D neg view)
    # to be fully free of per-step DMA overhead.
    if k_tile is not None:
        tk = int(k_tile)
    elif K <= 128:
        tk = K
    else:
        tn_nominal = max(row_align, min(tn_shard_cap, n_cap, 4096))
        tk = (TARGET_TILE_BYTES // max(1, tn_nominal * itemsize)) // 128 * 128
        tk = max(128, min(tk, _MAX_CHUNKS * 128, (K // 128) * 128))
    if tk > 128:
        assert tk % 128 == 0, "k_tile > 128 must be a multiple of 128"
    lanes = min(tk, 128)
    nkt = pl.cdiv(K, tk)

    # Row tile from the remaining byte budget, capped for TC sharding.
    if row_tile is not None:
        tn = int(row_tile)
    elif N <= row_align:
        tn = N
    else:
        cand = TARGET_TILE_BYTES // max(1, tk * itemsize)
        cand = max(row_align, (cand // row_align) * row_align)
        tn = min(cand, tn_shard_cap, n_cap, 4096)
    nrt = pl.cdiv(N, tn)

    if invalid is None:
        inval = jnp.zeros((N, 1), jnp.int32)
    else:
        inval = jnp.reshape(invalid, (N, 1)).astype(jnp.int32)

    kernel = functools.partial(
        _contrastive_ce_kernel,
        inv_temp=float(1.0 / temperature),
        n_rows=N, k_total=K, k_tile=tk, n_k_tiles=nkt, lanes=lanes)

    neg_spec_kwargs = {}
    if neg_buffers != 2:
        # e.g. 3-deep buffering to hide DMA jitter on v5e (sweep 2 vs 3).
        neg_spec_kwargs["pipeline_mode"] = pl.Buffered(int(neg_buffers))

    # Scoped-VMEM budget: streamed neg buffers + accumulator scratch + small
    # resident blocks, with headroom.  Safe on all chips (capped at 64 MiB).
    vmem_need = (neg_buffers * tn * tk * itemsize     # streamed neg tiles
                 + 2 * tn * lanes * 4                 # running max / sum-exp
                 + 4 * tn * 4                         # pos + invalid blocks
                 + 2 * 8 * 128 * 4)                   # output partial tile
    vmem_limit = max(32 * 1024 * 1024,
                     min(64 * 1024 * 1024, vmem_need + (4 << 20)))

    partials = pl.pallas_call(
        kernel,
        out_shape=jax.ShapeDtypeStruct((nrt, 8, 128), jnp.float32),
        grid=(nrt, nkt),
        in_specs=[
            pl.BlockSpec((tn, 1), lambda i, k: (i, 0)),      # pos (row-resident)
            pl.BlockSpec((tn, tk), lambda i, k: (i, k),      # neg (streamed over K)
                         **neg_spec_kwargs),
            pl.BlockSpec((tn, 1), lambda i, k: (i, 0)),      # invalid mask
        ],
        out_specs=pl.BlockSpec((1, 8, 128), lambda i, k: (i, 0, 0)),
        scratch_shapes=[
            pltpu.VMEM((tn, lanes), jnp.float32),   # lane-parallel running max
            pltpu.VMEM((tn, lanes), jnp.float32),   # lane-parallel running sum-exp
        ],
        compiler_params=pltpu.CompilerParams(
            dimension_semantics=("parallel", "arbitrary"),
            vmem_limit_bytes=int(vmem_limit)),
    )(pos, neg, inval)

    total = jnp.sum(partials[:, 0, 0])
    count = jnp.sum(partials[:, 1, 0])
    # NOTE: 0/0 -> NaN when every row is ignored, same as nn.CrossEntropyLoss.
    return total / count


def _reference_loss(pos, neg, invalid=None, temperature=0.1):
    """Pure-JAX reference (== nn.CrossEntropyLoss(ignore_index=255))."""
    logits = jnp.concatenate([pos.astype(jnp.float32),
                              neg.astype(jnp.float32)], axis=1) / temperature
    lse = jax.scipy.special.logsumexp(logits, axis=1)
    per_row = lse - logits[:, 0]
    if invalid is None:
        valid = jnp.ones((pos.shape[0],), jnp.float32)
    else:
        valid = 1.0 - jnp.reshape(invalid, (-1,)).astype(jnp.float32)
    return jnp.sum(per_row * valid) / jnp.sum(valid)


if __name__ == "__main__":
    key = jax.random.PRNGKey(0)
    k1, k2, k3, k4 = jax.random.split(key, 4)

    # --- small shapes consistent with the module: N samples, 1 pos, K negs --
    N, K = 8, 15
    pos = jax.random.normal(k1, (N, 1), dtype=jnp.float32)
    neg = jax.random.normal(k2, (N, K), dtype=jnp.float32)
    invalid = jnp.array([0, 0, 1, 0, 0, 0, 0, 1], dtype=jnp.bool_)

    loss = jax.block_until_ready(
        contrastive_head_loss(pos, neg, invalid, temperature=0.1))
    ref = _reference_loss(pos, neg, invalid, temperature=0.1)
    assert jnp.allclose(loss, ref, rtol=1e-5, atol=1e-5), (loss, ref)

    # --- tiled path: ragged row tail + ragged K tail (manual small tiles) ---
    N2, K2 = 100, 300
    p2 = jax.random.normal(k3, (N2, 1), dtype=jnp.float32)
    n2 = jax.random.normal(k4, (N2, K2), dtype=jnp.float32)
    inv2 = jax.random.uniform(k1, (N2,)) < 0.2
    loss2 = jax.block_until_ready(
        contrastive_head_loss(p2, n2, inv2, temperature=0.1,
                              row_tile=16, k_tile=128))
    ref2 = _reference_loss(p2, n2, inv2, temperature=0.1)
    assert jnp.allclose(loss2, ref2, rtol=1e-5, atol=1e-5), (loss2, ref2)

    # --- bf16 inputs stream natively through the auto-tiled path ------------
    loss3 = jax.block_until_ready(
        contrastive_head_loss(p2.astype(jnp.bfloat16), n2.astype(jnp.bfloat16),
                              inv2, temperature=0.1))
    ref3 = _reference_loss(p2.astype(jnp.bfloat16), n2.astype(jnp.bfloat16),
                           inv2, temperature=0.1)
    assert jnp.allclose(loss3, ref3, rtol=1e-4, atol=1e-4), (loss3, ref3)

    # --- multi-chunk lane-parallel two-pass fold + ragged K auto tiles ------
    N4, K4 = 64, 1500
    p4 = jax.random.normal(k2, (N4, 1), dtype=jnp.float32)
    n4 = jax.random.normal(k3, (N4, K4), dtype=jnp.float32)
    inv4 = jax.random.uniform(k4, (N4,)) < 0.25
    loss4 = jax.block_until_ready(
        contrastive_head_loss(p4, n4, inv4, temperature=0.1))
    ref4 = _reference_loss(p4, n4, inv4, temperature=0.1)
    assert jnp.allclose(loss4, ref4, rtol=2e-5, atol=1e-4), (loss4, ref4)

    print("KERNEL_OK")
</pallas_src>

<mosaic_0001>
module attributes {stable_mosaic.version = 11 : i64} {
  func.func @_contrastive_ce_kernel(%arg0: i32, %arg1: i32, %arg2: memref<8x1xf32, #tpu.memory_space<vmem>>, %arg3: memref<8x15xf32, #tpu.memory_space<vmem>>, %arg4: memref<8x1xi32, #tpu.memory_space<vmem>>, %arg5: memref<1x8x128xf32, #tpu.memory_space<vmem>>, %arg6: memref<8x15xf32, #tpu.memory_space<vmem>>, %arg7: memref<8x15xf32, #tpu.memory_space<vmem>>) attributes {dimension_semantics = [#tpu.dimension_semantics<parallel>, #tpu.dimension_semantics<arbitrary>], iteration_bounds = array<i64: 1, 1>, scalar_prefetch = 0 : i64, scratch_operands = 2 : i64, tpu.core_type = #tpu.core_type<tc>, window_params = [{transform_indices = @transform_0, window_bounds = array<i64: 8, 1>}, {transform_indices = @transform_1, window_bounds = array<i64: 8, 15>}, {transform_indices = @transform_2, window_bounds = array<i64: 8, 1>}, {transform_indices = @transform_3, window_bounds = array<i64: 1, 8, 128>}]} {
    %c0_i32 = arith.constant 0 : i32
    %0 = arith.cmpi eq, %arg1, %c0_i32 : i32
    %1 = arith.extui %0 : i1 to i32
    %c0_i32_0 = arith.constant 0 : i32
    %2 = arith.cmpi ne, %1, %c0_i32_0 : i32
    scf.if %2 {
      %cst_15 = arith.constant -2.38197633E+38 : f32
      %23 = vector.broadcast %cst_15 : f32 to vector<8x15xf32>
      %c0_16 = arith.constant 0 : index
      %c0_17 = arith.constant 0 : index
      %24 = vector.load %arg6[%c0_16, %c0_17] : memref<8x15xf32, #tpu.memory_space<vmem>>, vector<8x15xf32>
      tpu.vector_store %arg6[%c0_16, %c0_17], %23 {strides = array<i32>} : memref<8x15xf32, #tpu.memory_space<vmem>>, vector<8x15xf32>,
      %cst_18 = arith.constant 0.000000e+00 : f32
      %25 = vector.broadcast %cst_18 : f32 to vector<8x15xf32>
      %c0_19 = arith.constant 0 : index
      %c0_20 = arith.constant 0 : index
      %26 = vector.load %arg7[%c0_19, %c0_20] : memref<8x15xf32, #tpu.memory_space<vmem>>, vector<8x15xf32>
      tpu.vector_store %arg7[%c0_19, %c0_20], %25 {strides = array<i32>} : memref<8x15xf32, #tpu.memory_space<vmem>>, vector<8x15xf32>,
    } else {
    }
    %c0 = arith.constant 0 : index
    %c0_1 = arith.constant 0 : index
    %3 = vector.load %arg6[%c0, %c0_1] : memref<8x15xf32, #tpu.memory_space<vmem>>, vector<8x15xf32>
    %c0_2 = arith.constant 0 : index
    %c0_3 = arith.constant 0 : index
    %4 = vector.load %arg3[%c0_2, %c0_3] : memref<8x15xf32, #tpu.memory_space<vmem>>, vector<8x15xf32>
    %cst = arith.constant 1.000000e+01 : f32
    %5 = vector.broadcast %cst : f32 to vector<8x15xf32>
    %6 = arith.mulf %4, %5 : vector<8x15xf32>
    %7 = arith.maximumf %3, %6 : vector<8x15xf32>
    %c0_4 = arith.constant 0 : index
    %c0_5 = arith.constant 0 : index
    %8 = vector.load %arg7[%c0_4, %c0_5] : memref<8x15xf32, #tpu.memory_space<vmem>>, vector<8x15xf32>
    %9 = arith.subf %3, %7 : vector<8x15xf32>
    %10 = math.exp %9 : vector<8x15xf32>
    %11 = arith.mulf %8, %10 : vector<8x15xf32>
    %c0_6 = arith.constant 0 : index
    %c0_7 = arith.constant 0 : index
    %12 = vector.load %arg3[%c0_6, %c0_7] : memref<8x15xf32, #tpu.memory_space<vmem>>, vector<8x15xf32>
    %cst_8 = arith.constant 1.000000e+01 : f32
    %13 = vector.broadcast %cst_8 : f32 to vector<8x15xf32>
    %14 = arith.mulf %12, %13 : vector<8x15xf32>
    %15 = arith.subf %14, %7 : vector<8x15xf32>
    %16 = math.exp %15 : vector<8x15xf32>
    %17 = arith.addf %11, %16 : vector<8x15xf32>
    %c0_9 = arith.constant 0 : index
    %c0_10 = arith.constant 0 : index
    %18 = vector.load %arg6[%c0_9, %c0_10] : memref<8x15xf32, #tpu.memory_space<vmem>>, vector<8x15xf32>
    tpu.vector_store %arg6[%c0_9, %c0_10], %7 {strides = array<i32>} : memref<8x15xf32, #tpu.memory_space<vmem>>, vector<8x15xf32>,
    %c0_11 = arith.constant 0 : index
    %c0_12 = arith.constant 0 : index
    %19 = vector.load %arg7[%c0_11, %c0_12] : memref<8x15xf32, #tpu.memory_space<vmem>>, vector<8x15xf32>
    tpu.vector_store %arg7[%c0_11, %c0_12], %17 {strides = array<i32>} : memref<8x15xf32, #tpu.memory_space<vmem>>, vector<8x15xf32>,
    %c0_i32_13 = arith.constant 0 : i32
    %20 = arith.cmpi eq, %arg1, %c0_i32_13 : i32
    %21 = arith.extui %20 : i1 to i32
    %c0_i32_14 = arith.constant 0 : i32
    %22 = arith.cmpi ne, %21, %c0_i32_14 : i32
    scf.if %22 {
      %c0_15 = arith.constant 0 : index
      %c0_16 = arith.constant 0 : index
      %23 = vector.load %arg2[%c0_15, %c0_16] : memref<8x1xf32, #tpu.memory_space<vmem>>, vector<8x1xf32>
      %cst_17 = arith.constant 1.000000e+01 : f32
      %24 = vector.broadcast %cst_17 : f32 to vector<8x1xf32>
      %25 = arith.mulf %23, %24 : vector<8x1xf32>
      %c0_18 = arith.constant 0 : index
      %c0_19 = arith.constant 0 : index
      %26 = vector.load %arg6[%c0_18, %c0_19] : memref<8x15xf32, #tpu.memory_space<vmem>>, vector<8x15xf32>
      %c0_20 = arith.constant 0 : index
      %c0_21 = arith.constant 0 : index
      %27 = vector.load %arg7[%c0_20, %c0_21] : memref<8x15xf32, #tpu.memory_space<vmem>>, vector<8x15xf32>
      %cst_22 = arith.constant dense<0xFF800000> : vector<8xf32>
      %28 = vector.multi_reduction <maximumf>, %26, %cst_22 [1] : vector<8x15xf32> to vector<8xf32>
      %29 = vector.shape_cast %28 : vector<8xf32> to vector<8x1xf32>
      %30 = vector.broadcast %29 : vector<8x1xf32> to vector<8x15xf32>
      %31 = arith.subf %26, %30 : vector<8x15xf32>
      %32 = math.exp %31 : vector<8x15xf32>
      %33 = arith.mulf %27, %32 : vector<8x15xf32>
      %cst_23 = arith.constant dense<0.000000e+00> : vector<8xf32>
      %34 = vector.multi_reduction <add>, %33, %cst_23 [1] : vector<8x15xf32> to vector<8xf32>
      %35 = vector.shape_cast %34 : vector<8xf32> to vector<8x1xf32>
      %36 = arith.maximumf %29, %25 : vector<8x1xf32>
      %37 = arith.subf %29, %36 : vector<8x1xf32>
      %38 = math.exp %37 : vector<8x1xf32>
      %39 = arith.mulf %35, %38 : vector<8x1xf32>
      %40 = arith.subf %25, %36 : vector<8x1xf32>
      %41 = math.exp %40 : vector<8x1xf32>
      %42 = arith.addf %39, %41 : vector<8x1xf32>
      %43 = math.log %42 : vector<8x1xf32>
      %44 = arith.addf %36, %43 : vector<8x1xf32>
      %45 = arith.subf %44, %25 : vector<8x1xf32>
      %c0_24 = arith.constant 0 : index
      %c0_25 = arith.constant 0 : index
      %46 = vector.load %arg4[%c0_24, %c0_25] : memref<8x1xi32, #tpu.memory_space<vmem>>, vector<8x1xi32>
      %c0_i32_26 = arith.constant 0 : i32
      %47 = vector.broadcast %c0_i32_26 : i32 to vector<8x1xi32>
      %48 = arith.cmpi eq, %46, %47 : vector<8x1xi32>
      %cst_27 = arith.constant 0.000000e+00 : f32
      %49 = vector.broadcast %cst_27 : f32 to vector<8x1xf32>
      %50 = arith.select %48, %45, %49 : vector<8x1xi1>, vector<8x1xf32>
      %51 = vector.shape_cast %50 : vector<8x1xf32> to vector<1x8x1xf32>
      %cst_28 = arith.constant dense<0.000000e+00> : vector<1xf32>
      %52 = vector.multi_reduction <add>, %51, %cst_28 [1, 2] : vector<1x8x1xf32> to vector<1xf32>
      %53 = vector.shape_cast %52 : vector<1xf32> to vector<1x1x1xf32>
      %54 = vector.extract %53[0, 0, 0] : f32 from vector<1x1x1xf32>
      %55 = arith.extui %48 : vector<8x1xi1> to vector<8x1xi32>
      %56 = arith.sitofp %55 : vector<8x1xi32> to vector<8x1xf32>
      %57 = vector.shape_cast %56 : vector<8x1xf32> to vector<1x8x1xf32>
      %cst_29 = arith.constant dense<0.000000e+00> : vector<1xf32>
      %58 = vector.multi_reduction <add>, %57, %cst_29 [1, 2] : vector<1x8x1xf32> to vector<1xf32>
      %59 = vector.shape_cast %58 : vector<1xf32> to vector<1x1x1xf32>
      %60 = vector.extract %59[0, 0, 0] : f32 from vector<1x1x1xf32>
      %61 = tpu.iota {dimensions = array<i32: 1>} : vector<1x8x128xi32>
      %c0_i32_30 = arith.constant 0 : i32
      %62 = vector.broadcast %c0_i32_30 : i32 to vector<1x8x128xi32>
      %63 = arith.cmpi eq, %61, %62 : vector<1x8x128xi32>
      %c1_i32 = arith.constant 1 : i32
      %64 = vector.broadcast %c1_i32 : i32 to vector<1x8x128xi32>
      %65 = arith.cmpi eq, %61, %64 : vector<1x8x128xi32>
      %cst_31 = arith.constant 0.000000e+00 : f32
      %66 = vector.broadcast %60 : f32 to vector<1x8x128xf32>
      %67 = vector.broadcast %cst_31 : f32 to vector<1x8x128xf32>
      %68 = arith.select %65, %66, %67 : vector<1x8x128xi1>, vector<1x8x128xf32>
      %69 = vector.broadcast %54 : f32 to vector<1x8x128xf32>
      %70 = arith.select %63, %69, %68 : vector<1x8x128xi1>, vector<1x8x128xf32>
      %c0_32 = arith.constant 0 : index
      %c0_33 = arith.constant 0 : index
      %c0_34 = arith.constant 0 : index
      %71 = vector.load %arg5[%c0_32, %c0_33, %c0_34] : memref<1x8x128xf32, #tpu.memory_space<vmem>>, vector<1x8x128xf32>
      tpu.vector_store %arg5[%c0_32, %c0_33, %c0_34], %70 {strides = array<i32>} : memref<1x8x128xf32, #tpu.memory_space<vmem>>, vector<1x8x128xf32>,
    } else {
    }
    return
  }
  func.func @transform_0(%arg0: i32, %arg1: i32) -> (i32, i32) {
    %c0_i32 = arith.constant 0 : i32
    %c0_i32_0 = arith.constant 0 : i32
    return %arg0, %c0_i32 : i32, i32
  }
  func.func @transform_1(%arg0: i32, %arg1: i32) -> (i32, i32) {
    %c0_i32 = arith.constant 0 : i32
    return %arg0, %arg1 : i32, i32
  }
  func.func @transform_2(%arg0: i32, %arg1: i32) -> (i32, i32) {
    %c0_i32 = arith.constant 0 : i32
    %c0_i32_0 = arith.constant 0 : i32
    return %arg0, %c0_i32 : i32, i32
  }
  func.func @transform_3(%arg0: i32, %arg1: i32) -> (i32, i32, i32) {
    %c0_i32 = arith.constant 0 : i32
    %c0_i32_0 = arith.constant 0 : i32
    %c0_i32_1 = arith.constant 0 : i32
    return %arg0, %c0_i32, %c0_i32_0 : i32, i32, i32
  }
}

</mosaic_0001>

<llo_original>
// kernel: tpu_custom_call.1
$region0: #{tpu_custom_call.1}
  #allocation0 [shape = 'u32[]', space=smem, size = 0x4, offset = 0x4, fixed_abs, tag = 'smem constant byte address 0x4 - core index']
  #allocation1 [shape = 'u32[144,128]{1,0:T(1,128)}', space=vmem, size = 0x12000, scoped, tag = 'internal scratch']
  #allocation2 [shape = 'f32[8,15]{1,0:T(8,128)}', space=vmem, size = 0x1000, scoped, tag = 'scratch operand']
  #allocation3 [shape = 'f32[8,15]{1,0:T(8,128)}', space=vmem, size = 0x1000, scoped, tag = 'scratch operand']
  %s0 = inlined_call_operand.vmem [shape: f32[8,1], index: 0, kind: input, shape index: {}]
  %s1 = inlined_call_operand.vmem [shape: f32[8,15], index: 1, kind: input, shape index: {}]
  %s2 = inlined_call_operand.vmem [shape: s32[8,1], index: 2, kind: input, shape index: {}]
  %s3 = inlined_call_operand.hbm [shape: f32[1,8,128], index: 3, kind: output, shape index: {}]
  %s4 = sld [smem:[#allocation0]]
  $region30: #{tpu_custom_call.1} parent=0
    _
  %s6 = ssub.s32 1, %s4
  %s7 = scalar_select 0, %s6, %s4
  $region1: #{tpu_custom_call.1} parent=0
    #allocation4 [shape = 'u8[4096]{0}', space=vmem, size = 0x1000, scoped, tag = 'output window, operand 0, single buffered']
    #allocation5 [shape = 's32[1]{0}', space=sflag, size = 0x4, scoped, tag = 'scoped memory for tpu_custom_call.1']
    %8 = vsyncpa [#allocation5], 0
    // Predicated region
    $region2: #{tpu_custom_call.1} parent=1 // pred_check
      _
    $region3: #{tpu_custom_call.1} parent=1 // pred_check_branch
      %10 = sbr.rel (0) target = $region5
    $region4: #{tpu_custom_call.1} parent=1 // pred_region
      _
    $region5: #{tpu_custom_call.1} parent=1 // pred_fallthru
      _
    // Predicated region
    $region6: #{tpu_custom_call.1} parent=1 // pred_check
      _
    $region7: #{tpu_custom_call.1} parent=1 // pred_check_branch
      %12 = sbr.rel (0) target = $region9
    $region8: #{tpu_custom_call.1} parent=1 // pred_region
      _
    $region9: #{tpu_custom_call.1} parent=1 // pred_fallthru
      _
    // Predicated region
    $region10: #{tpu_custom_call.1} parent=1 // pred_check
      _
    $region11: #{tpu_custom_call.1} parent=1 // pred_check_branch
      %14 = sbr.rel (0) target = $region13
    $region12: #{tpu_custom_call.1} parent=1 // pred_region
      _
    $region13: #{tpu_custom_call.1} parent=1 // pred_fallthru
      _
    %p15 = scmp.eq.s32.totalorder 0, 0
    // Predicated region
    $region14: #{tpu_custom_call.1} parent=1 // pred_check
      %p16 = pneg %p15
    $region15: #{tpu_custom_call.1} parent=1 // pred_check_branch
      %18 = sbr.rel (%p16) target = $region17
    $region16: #{tpu_custom_call.1} parent=1 // pred_region
      %vm19 = vcmask 121856
      %20 = vst.msk [vmem:[#allocation2] sm:$0xff] %vm19, -2.3819763e+38
      %21 = vst.msk [vmem:[#allocation3] sm:$0xff] %vm19, 0.0
    $region17: #{tpu_custom_call.1} parent=1 // pred_fallthru
      _
    %v22 = vld [vmem:[#allocation2] sm:$0xff]
    %v23 = vld [vmem:[%s1] sm:$0xff]
    %v24 = vmul.f32 %v23, 10.0
    %v25 = vmax.f32 %v22, %v24
    %v26 = vld [vmem:[#allocation3] sm:$0xff]
    %v27 = vsub.f32 %v22, %v25
    %v28 = vmul.f32 %v27, 1.442695
    %v29 = vpow.pop %v28
    %v30 = vmul.f32 %v26, %v29
    %v31 = vsub.f32 %v24, %v25
    %v32 = vmul.f32 %v31, 1.442695
    %v33 = vpow.pop %v32
    %v34 = vadd.f32 %v30, %v33
    %vm35 = vcmask 121856
    %36 = vst.msk [vmem:[#allocation2] sm:$0xff] %vm35, %v25
    %37 = vst.msk [vmem:[#allocation3] sm:$0xff] %vm35, %v34
    // Predicated region
    $region18: #{tpu_custom_call.1} parent=1 // pred_check
      %p38 = pneg %p15
    $region19: #{tpu_custom_call.1} parent=1 // pred_check_branch
      %40 = sbr.rel (%p38) target = $region21
    $region20: #{tpu_custom_call.1} parent=1 // pred_region
      %v41 = vld [vmem:[%s0] sm:$0xff]
      %v42 = vmul.f32 %v41, 10.0
      %v43 = vld [vmem:[#allocation2] sm:$0xff]
      %v44 = vld [vmem:[#allocation3] sm:$0xff]
      %v45 = vsel %vm35, %v43, -inf
      %46 = vmax.xlane.f32.xlu0 %v45
      %v47 = vpop.xlane.xlu0 %46
      %v48 = vsub.f32 %v43, %v47
      %v49 = vmul.f32 %v48, 1.442695
      %v50 = vpow.pop %v49
      %v51 = vmul.f32 %v44, %v50
      %v52 = vsel %vm35, %v51, 0.0
      %53 = vadd.xlane.f32.xlu0 %v52
      %v54 = vpop.xlane.xlu0 %53
      %v55 = vmax.f32 %v47, %v42
      %v56 = vsub.f32 %v47, %v55
      %v57 = vmul.f32 %v56, 1.442695
      %v58 = vpow.pop %v57
      %v59 = vmul.f32 %v54, %v58
      %v60 = vsub.f32 %v42, %v55
      %v61 = vmul.f32 %v60, 1.442695
      %v62 = vpow.pop %v61
      %v63 = vadd.f32 %v59, %v62
      %v64 = vlog2.pop %v63
      %v65 = vmul.f32 %v64, 0.6931472
      %v66 = vadd.f32 %v55, %v65
      %v67 = vsub.f32 %v66, %v42
      %v68 = vld [vmem:[%s2] sm:$0xff]
      %vm69 = vcmp.eq.s32.totalorder %v68, 0
      %v70 = vsel %vm69, %v67, 0.0
      %vm71 = vcmask 7168
      %v72 = vsel %vm71, %v70, 0.0
      %73 = vadd.xlane.f32.xlu0 %v72
      %v74 = vpop.xlane.xlu0 %73
      %v75 = vrot.slane %v74, 4
      %v76 = vadd.f32 %v74, %v75
      %v77 = vrot.slane %v76, 2
      %v78 = vadd.f32 %v76, %v77
      %v79 = vrot.slane %v78, 1
      %v80 = vadd.f32 %v78, %v79
      %s81 = vtos %v80
      %v82 = vsel %vm69, 1, 0
      %v83 = vcvt.s32.f32 %v82
      %v84 = vsel %vm71, %v83, 0.0
      %85 = vadd.xlane.f32.xlu0 %v84
      %v86 = vpop.xlane.xlu0 %85
      %v87 = vrot.slane %v86, 4
      %v88 = vadd.f32 %v86, %v87
      %v89 = vrot.slane %v88, 2
      %v90 = vadd.f32 %v88, %v89
      %v91 = vrot.slane %v90, 1
      %v92 = vadd.f32 %v90, %v91
      %s93 = vtos %v92
      %v94 = vlaneseq
      %v95 = vshrl.u32 %v94, 7
      %vm96 = vcmp.eq.s32.totalorder %v95, 0
      %vm97 = vcmp.eq.s32.totalorder %v95, 1
      %v98 = vstv %s93
      %v99 = vsel %vm97, %v98, 0.0
      %v100 = vstv %s81
      %v101 = vsel %vm96, %v100, %v99
      %102 = vst [vmem:[#allocation4] sm:$0xff] %v101
    $region21: #{tpu_custom_call.1} parent=1 // pred_fallthru
      _
    // Predicated region
    $region22: #{tpu_custom_call.1} parent=1 // pred_check
      _
    $region23: #{tpu_custom_call.1} parent=1 // pred_check_branch
      %104 = sbr.rel (0) target = $region25
    $region24: #{tpu_custom_call.1} parent=1 // pred_region
      %s106 = ssub.s32 128, 128
      %107 = vsyncadd [#allocation5], %s106
      %s109 = sshll.u32 [#allocation4], 4
      %s110 = int_to_ptr.vmem [resolvable:$true] %s109
      %112 = dma.vmem_to_hbm [thread:$0]  %s110, 128, %s3, [#allocation5]
    $region25: #{tpu_custom_call.1} parent=1 // pred_fallthru
      _
    // Predicated region
    $region26: #{tpu_custom_call.1} parent=1 // pred_check
      _
    $region27: #{tpu_custom_call.1} parent=1 // pred_check_branch
      %114 = sbr.rel (0) target = $region29
    $region28: #{tpu_custom_call.1} parent=1 // pred_region
      %115 = dma.done [#allocation5], 128
    $region29: #{tpu_custom_call.1} parent=1 // pred_fallthru
      _
    %116 = vsyncpa [#allocation5], 1

</llo_original>
